<compile_context>
chip_gen: v7x
topology: tpu7x:2x2x1
jax: 0.10.0
libtpu: 0.0.40
codegen_flags: <defaults>
</compile_context>

<pallas_src>
import functools

import jax
import jax.numpy as jnp
from jax.experimental import pallas as pl
from jax.experimental.pallas import tpu as pltpu


def _leaky(x, slope=0.1):
    # LeakyReLU(0.1): max(x, 0.1*x) == x for x > 0, 0.1*x for x <= 0.
    return jnp.maximum(x, slope * x)


def _ffn_kernel(x_ref, m_ref, w1_ref, wd_ref, w2_ref, o_ref, *, width):
    # x_ref : (1, C, R)  one image, spatial flattened (R = H*W on lanes)
    # m_ref : (4, R)     f32 border masks [has_left, has_right, has_up, has_down]
    # w1_ref: (C, C)     first 1x1 conv,  [C_out, C_in]   (MXU dtype)
    # wd_ref: (C, 9)     depthwise 3x3 weights, column = kh*3 + kw   (f32)
    # w2_ref: (C, C)     second 1x1 conv, [C_out, C_in]   (MXU dtype)
    # o_ref : (1, C, R)
    W = width
    _, C, R = x_ref.shape
    mdt = w1_ref.dtype

    x = x_ref[0].astype(mdt)                 # (C, R)
    w1 = w1_ref[...]
    w2 = w2_ref[...]
    wd = wd_ref[...]                         # (C, 9) f32

    has_left = m_ref[0:1, :]                 # (1, R): w-1 in bounds
    has_right = m_ref[1:2, :]                # (1, R): w+1 in bounds
    has_up = m_ref[2:3, :]                   # (1, R): h-1 in bounds
    has_down = m_ref[3:4, :]                 # (1, R): h+1 in bounds

    # ---- 1x1 conv #1 (MXU, f32 accumulation) + LeakyReLU ----
    t = _leaky(jnp.dot(w1, x, preferred_element_type=jnp.float32))   # (C, R) f32

    # ---- depthwise 3x3 (groups=C), zero padding = 1 ----
    # With r = h*W + w, the vertical neighbours (h-1, w) / (h+1, w) are lane
    # rotations by +/- W (XLU); the wrapped lanes are exactly the ones the
    # image-border masks zero out.
    up = has_up * pltpu.roll(t, W, axis=1)           # value at (h-1, w)
    down = has_down * pltpu.roll(t, R - W, axis=1)   # value at (h+1, w)

    def tap(k):                                      # per-channel weight, k = kh*3 + kw
        return wd[:, k:k + 1]                        # (C, 1) -> broadcast over lanes

    # Combine the three rows per kernel column first, then shift each column
    # sum horizontally once (left/right kernel columns read w-1 / w+1).
    left_src = tap(0) * up + tap(3) * t + tap(6) * down
    right_src = tap(2) * up + tap(5) * t + tap(8) * down

    acc = tap(1) * up + tap(4) * t + tap(7) * down
    acc = acc + has_left * pltpu.roll(left_src, 1, axis=1)
    acc = acc + has_right * pltpu.roll(right_src, R - 1, axis=1)
    t2 = _leaky(acc)

    # ---- 1x1 conv #2 (MXU) ----
    out = jnp.dot(w2, t2.astype(mdt), preferred_element_type=jnp.float32)
    o_ref[0] = out.astype(o_ref.dtype)


def _vmem_limit_bytes():
    """Per-generation scoped-VMEM request (v5e/v6e: ~96 MiB, v7x: ~48 MiB)."""
    try:
        phys = int(pltpu.get_tpu_info().vmem_capacity_bytes)
        return max(32 << 20, min((phys * 3) // 4, 112 << 20))
    except Exception:
        return 48 << 20


@functools.partial(jax.jit, static_argnames=("mxu_dtype", "io_dtype"))
def feed_forward_pallas(x_nchw, w1_pt, wd_pt, w2_pt, *,
                        mxu_dtype=jnp.bfloat16, io_dtype=jnp.bfloat16):
    """FeedForward forward pass with PyTorch layouts.

    x_nchw : (N, C, H, W); w1_pt / w2_pt : (C_out, C_in, 1, 1); wd_pt : (C, 1, 3, 3).
    Returns (N, C, H, W) in io_dtype (cast back outside only if needed).
    """
    N, C, H, W = x_nchw.shape
    R = H * W
    assert w1_pt.shape == (C, C, 1, 1) and w2_pt.shape == (C, C, 1, 1)
    assert wd_pt.shape == (C, 1, 3, 3)

    # bf16 at the HBM boundary (kernel is HBM-bandwidth bound); the
    # NCHW -> (N, C, H*W) reshape is metadata-only (no HBM pass).
    x = x_nchw.reshape(N, C, R).astype(io_dtype)
    w1 = w1_pt[:, :, 0, 0].astype(mxu_dtype)            # (C_out, C_in)
    w2 = w2_pt[:, :, 0, 0].astype(mxu_dtype)
    wd = wd_pt[:, 0].reshape(C, 9).astype(jnp.float32)  # (C, kh*3 + kw)

    # Border masks over the flattened spatial axis, computed once outside the
    # kernel (keeps iota/mod work off the in-kernel VALU path).
    r_idx = jnp.arange(R, dtype=jnp.int32)
    col = r_idx % W
    masks = jnp.stack([col != 0,          # has a left neighbour  (w-1)
                       col != W - 1,      # has a right neighbour (w+1)
                       r_idx >= W,        # has a row above       (h-1)
                       r_idx < R - W]     # has a row below       (h+1)
                      ).astype(jnp.float32)               # (4, R)

    out = pl.pallas_call(
        functools.partial(_ffn_kernel, width=W),
        out_shape=jax.ShapeDtypeStruct((N, C, R), io_dtype),
        grid_spec=pltpu.PrefetchScalarGridSpec(
            num_scalar_prefetch=0,
            grid=(N,),
            in_specs=[
                pl.BlockSpec((1, C, R), lambda n: (n, 0, 0)),
                # constant index maps -> fetched once, stay resident in VMEM
                pl.BlockSpec((4, R), lambda n: (0, 0)),
                pl.BlockSpec((C, C), lambda n: (0, 0)),
                pl.BlockSpec((C, 9), lambda n: (0, 0)),
                pl.BlockSpec((C, C), lambda n: (0, 0)),
            ],
            out_specs=pl.BlockSpec((1, C, R), lambda n: (n, 0, 0)),
        ),
        compiler_params=pltpu.CompilerParams(
            dimension_semantics=("parallel",),
            vmem_limit_bytes=_vmem_limit_bytes(),
        ),
    )(x, masks, w1, wd, w2)

    return out.reshape(N, C, H, W)


def feed_forward_ref(x_nchw, w1_pt, wd_pt, w2_pt):
    """Pure-JAX f32 reference with PyTorch layouts/semantics (for checking)."""
    N, C, H, W = x_nchw.shape
    hp = jax.lax.Precision.HIGHEST
    t = _leaky(jnp.einsum('nihw,oi->nohw', x_nchw, w1_pt[:, :, 0, 0], precision=hp))
    tp = jnp.pad(t, ((0, 0), (0, 0), (1, 1), (1, 1)))
    acc = jnp.zeros_like(t)
    for kh in range(3):
        for kw in range(3):
            acc = acc + (tp[:, :, kh:kh + H, kw:kw + W]
                         * wd_pt[:, 0, kh, kw][None, :, None, None])
    t2 = _leaky(acc)
    return jnp.einsum('nihw,oi->nohw', t2, w2_pt[:, :, 0, 0], precision=hp)


if __name__ == "__main__":
    # Small deterministic example: batch=2, channels=8, spatial=16x16.
    N, C, H, W = 2, 8, 16, 16
    key = jax.random.PRNGKey(0)
    kx, k1, kd, k2 = jax.random.split(key, 4)

    x = jax.random.normal(kx, (N, C, H, W), dtype=jnp.float32)
    # Parameters in PyTorch Conv2d layout, initialized in-script.
    w1_pt = 0.1 * jax.random.normal(k1, (C, C, 1, 1), dtype=jnp.float32)
    wd_pt = 0.1 * jax.random.normal(kd, (C, 1, 3, 3), dtype=jnp.float32)
    w2_pt = 0.1 * jax.random.normal(k2, (C, C, 1, 1), dtype=jnp.float32)

    ref = jax.block_until_ready(feed_forward_ref(x, w1_pt, wd_pt, w2_pt))

    # 1) Strict semantic check: all-f32 IO + f32 MXU path.
    out_f32 = jax.block_until_ready(
        feed_forward_pallas(x, w1_pt, wd_pt, w2_pt,
                            mxu_dtype=jnp.float32, io_dtype=jnp.float32))
    assert out_f32.shape == (N, C, H, W)
    err_f32 = float(jnp.max(jnp.abs(out_f32.astype(jnp.float32) - ref)))
    assert err_f32 < 5e-3, f"f32 path mismatch vs reference (max abs err {err_f32})"

    # 2) Production fast path: bf16 HBM IO + bf16 MXU inputs, f32 accumulation.
    out_bf16 = jax.block_until_ready(feed_forward_pallas(x, w1_pt, wd_pt, w2_pt))
    err_bf16 = float(jnp.max(jnp.abs(out_bf16.astype(jnp.float32) - ref)))
    assert err_bf16 < 5e-2, f"bf16 path mismatch vs reference (max abs err {err_bf16})"

    print("KERNEL_OK")
</pallas_src>

<mosaic_0001>
module attributes {stable_mosaic.version = 11 : i64} {
  func.func @_ffn_kernel(%arg0: i32, %arg1: memref<1x8x256xf32, #tpu.memory_space<vmem>>, %arg2: memref<4x256xf32, #tpu.memory_space<vmem>>, %arg3: memref<8x8xf32, #tpu.memory_space<vmem>>, %arg4: memref<8x9xf32, #tpu.memory_space<vmem>>, %arg5: memref<8x8xf32, #tpu.memory_space<vmem>>, %arg6: memref<1x8x256xf32, #tpu.memory_space<vmem>>) attributes {dimension_semantics = [#tpu.dimension_semantics<parallel>], iteration_bounds = array<i64: 2>, scalar_prefetch = 0 : i64, scratch_operands = 0 : i64, tpu.core_type = #tpu.core_type<tc>, window_params = [{transform_indices = @transform_0, window_bounds = array<i64: 1, 8, 256>}, {pipeline_mode = #tpu.pipeline_mode<synchronous>, transform_indices = @transform_1, window_bounds = array<i64: 4, 256>}, {pipeline_mode = #tpu.pipeline_mode<synchronous>, transform_indices = @transform_2, window_bounds = array<i64: 8, 8>}, {pipeline_mode = #tpu.pipeline_mode<synchronous>, transform_indices = @transform_3, window_bounds = array<i64: 8, 9>}, {pipeline_mode = #tpu.pipeline_mode<synchronous>, transform_indices = @transform_4, window_bounds = array<i64: 8, 8>}, {transform_indices = @transform_5, window_bounds = array<i64: 1, 8, 256>}]} {
    %c0 = arith.constant 0 : index
    %c0_0 = arith.constant 0 : index
    %c0_1 = arith.constant 0 : index
    %0 = vector.load %arg1[%c0, %c0_0, %c0_1] : memref<1x8x256xf32, #tpu.memory_space<vmem>>, vector<1x8x256xf32>
    %1 = vector.shape_cast %0 : vector<1x8x256xf32> to vector<8x256xf32>
    %c0_2 = arith.constant 0 : index
    %c0_3 = arith.constant 0 : index
    %2 = vector.load %arg3[%c0_2, %c0_3] : memref<8x8xf32, #tpu.memory_space<vmem>>, vector<8x8xf32>
    %c0_4 = arith.constant 0 : index
    %c0_5 = arith.constant 0 : index
    %3 = vector.load %arg5[%c0_4, %c0_5] : memref<8x8xf32, #tpu.memory_space<vmem>>, vector<8x8xf32>
    %c0_6 = arith.constant 0 : index
    %c0_7 = arith.constant 0 : index
    %4 = vector.load %arg4[%c0_6, %c0_7] : memref<8x9xf32, #tpu.memory_space<vmem>>, vector<8x9xf32>
    %c0_8 = arith.constant 0 : index
    %c0_9 = arith.constant 0 : index
    %5 = vector.load %arg2[%c0_8, %c0_9] : memref<4x256xf32, #tpu.memory_space<vmem>>, vector<1x256xf32>
    %c1 = arith.constant 1 : index
    %c0_10 = arith.constant 0 : index
    %6 = vector.load %arg2[%c1, %c0_10] : memref<4x256xf32, #tpu.memory_space<vmem>>, vector<1x256xf32>
    %c2 = arith.constant 2 : index
    %c0_11 = arith.constant 0 : index
    %7 = vector.load %arg2[%c2, %c0_11] : memref<4x256xf32, #tpu.memory_space<vmem>>, vector<1x256xf32>
    %c3 = arith.constant 3 : index
    %c0_12 = arith.constant 0 : index
    %8 = vector.load %arg2[%c3, %c0_12] : memref<4x256xf32, #tpu.memory_space<vmem>>, vector<1x256xf32>
    %cst = arith.constant dense<0.000000e+00> : vector<8x256xf32>
    %9 = tpu.matmul %2, %1, %cst {dimension_numbers = #tpu.dot_dimension_numbers<[1], [0], [0], [1], [0, 0, 1, 1], [], []>} : vector<8x8xf32>, vector<8x256xf32>, vector<8x256xf32> -> vector<8x256xf32>
    %cst_13 = arith.constant 1.000000e-01 : f32
    %10 = vector.broadcast %cst_13 : f32 to vector<8x256xf32>
    %11 = arith.mulf %10, %9 : vector<8x256xf32>
    %12 = arith.maximumf %9, %11 : vector<8x256xf32>
    %c16_i32 = arith.constant 16 : i32
    %13 = tpu.dynamic_rotate %12 by %c16_i32 dim 1 : vector<8x256xf32>, i32 -> vector<8x256xf32>
    %14 = vector.broadcast %7 : vector<1x256xf32> to vector<8x256xf32>
    %15 = arith.mulf %14, %13 : vector<8x256xf32>
    %c240_i32 = arith.constant 240 : i32
    %16 = tpu.dynamic_rotate %12 by %c240_i32 dim 1 : vector<8x256xf32>, i32 -> vector<8x256xf32>
    %17 = vector.broadcast %8 : vector<1x256xf32> to vector<8x256xf32>
    %18 = arith.mulf %17, %16 : vector<8x256xf32>
    %19 = vector.extract_strided_slice %4 {offsets = [0, 0], sizes = [8, 1], strides = [1, 1]} : vector<8x9xf32> to vector<8x1xf32>
    %20 = vector.broadcast %19 : vector<8x1xf32> to vector<8x256xf32>
    %21 = arith.mulf %20, %15 : vector<8x256xf32>
    %22 = vector.extract_strided_slice %4 {offsets = [0, 3], sizes = [8, 1], strides = [1, 1]} : vector<8x9xf32> to vector<8x1xf32>
    %23 = vector.broadcast %22 : vector<8x1xf32> to vector<8x256xf32>
    %24 = arith.mulf %23, %12 : vector<8x256xf32>
    %25 = arith.addf %21, %24 : vector<8x256xf32>
    %26 = vector.extract_strided_slice %4 {offsets = [0, 6], sizes = [8, 1], strides = [1, 1]} : vector<8x9xf32> to vector<8x1xf32>
    %27 = vector.broadcast %26 : vector<8x1xf32> to vector<8x256xf32>
    %28 = arith.mulf %27, %18 : vector<8x256xf32>
    %29 = arith.addf %25, %28 : vector<8x256xf32>
    %30 = vector.extract_strided_slice %4 {offsets = [0, 2], sizes = [8, 1], strides = [1, 1]} : vector<8x9xf32> to vector<8x1xf32>
    %31 = vector.broadcast %30 : vector<8x1xf32> to vector<8x256xf32>
    %32 = arith.mulf %31, %15 : vector<8x256xf32>
    %33 = vector.extract_strided_slice %4 {offsets = [0, 5], sizes = [8, 1], strides = [1, 1]} : vector<8x9xf32> to vector<8x1xf32>
    %34 = vector.broadcast %33 : vector<8x1xf32> to vector<8x256xf32>
    %35 = arith.mulf %34, %12 : vector<8x256xf32>
    %36 = arith.addf %32, %35 : vector<8x256xf32>
    %37 = vector.extract_strided_slice %4 {offsets = [0, 8], sizes = [8, 1], strides = [1, 1]} : vector<8x9xf32> to vector<8x1xf32>
    %38 = vector.broadcast %37 : vector<8x1xf32> to vector<8x256xf32>
    %39 = arith.mulf %38, %18 : vector<8x256xf32>
    %40 = arith.addf %36, %39 : vector<8x256xf32>
    %41 = vector.extract_strided_slice %4 {offsets = [0, 1], sizes = [8, 1], strides = [1, 1]} : vector<8x9xf32> to vector<8x1xf32>
    %42 = vector.broadcast %41 : vector<8x1xf32> to vector<8x256xf32>
    %43 = arith.mulf %42, %15 : vector<8x256xf32>
    %44 = vector.extract_strided_slice %4 {offsets = [0, 4], sizes = [8, 1], strides = [1, 1]} : vector<8x9xf32> to vector<8x1xf32>
    %45 = vector.broadcast %44 : vector<8x1xf32> to vector<8x256xf32>
    %46 = arith.mulf %45, %12 : vector<8x256xf32>
    %47 = arith.addf %43, %46 : vector<8x256xf32>
    %48 = vector.extract_strided_slice %4 {offsets = [0, 7], sizes = [8, 1], strides = [1, 1]} : vector<8x9xf32> to vector<8x1xf32>
    %49 = vector.broadcast %48 : vector<8x1xf32> to vector<8x256xf32>
    %50 = arith.mulf %49, %18 : vector<8x256xf32>
    %51 = arith.addf %47, %50 : vector<8x256xf32>
    %c1_i32 = arith.constant 1 : i32
    %52 = tpu.dynamic_rotate %29 by %c1_i32 dim 1 : vector<8x256xf32>, i32 -> vector<8x256xf32>
    %53 = vector.broadcast %5 : vector<1x256xf32> to vector<8x256xf32>
    %54 = arith.mulf %53, %52 : vector<8x256xf32>
    %55 = arith.addf %51, %54 : vector<8x256xf32>
    %c255_i32 = arith.constant 255 : i32
    %56 = tpu.dynamic_rotate %40 by %c255_i32 dim 1 : vector<8x256xf32>, i32 -> vector<8x256xf32>
    %57 = vector.broadcast %6 : vector<1x256xf32> to vector<8x256xf32>
    %58 = arith.mulf %57, %56 : vector<8x256xf32>
    %59 = arith.addf %55, %58 : vector<8x256xf32>
    %cst_14 = arith.constant 1.000000e-01 : f32
    %60 = vector.broadcast %cst_14 : f32 to vector<8x256xf32>
    %61 = arith.mulf %60, %59 : vector<8x256xf32>
    %62 = arith.maximumf %59, %61 : vector<8x256xf32>
    %cst_15 = arith.constant dense<0.000000e+00> : vector<8x256xf32>
    %63 = tpu.matmul %3, %62, %cst_15 {dimension_numbers = #tpu.dot_dimension_numbers<[1], [0], [0], [1], [0, 0, 1, 1], [], []>} : vector<8x8xf32>, vector<8x256xf32>, vector<8x256xf32> -> vector<8x256xf32>
    %c0_16 = arith.constant 0 : index
    %c0_17 = arith.constant 0 : index
    %c0_18 = arith.constant 0 : index
    %64 = vector.load %arg6[%c0_16, %c0_17, %c0_18] : memref<1x8x256xf32, #tpu.memory_space<vmem>>, vector<1x8x256xf32>
    %65 = vector.shape_cast %64 : vector<1x8x256xf32> to vector<8x256xf32>
    %66 = vector.shape_cast %63 : vector<8x256xf32> to vector<1x8x256xf32>
    tpu.vector_store %arg6[%c0_16, %c0_17, %c0_18], %66 {strides = array<i32>} : memref<1x8x256xf32, #tpu.memory_space<vmem>>, vector<1x8x256xf32>,
    return
  }
  func.func @transform_0(%arg0: i32) -> (i32, i32, i32) {
    %c0_i32 = arith.constant 0 : i32
    %c0_i32_0 = arith.constant 0 : i32
    %c0_i32_1 = arith.constant 0 : i32
    return %arg0, %c0_i32, %c0_i32_0 : i32, i32, i32
  }
  func.func @transform_1(%arg0: i32) -> (i32, i32) {
    %c0_i32 = arith.constant 0 : i32
    %c0_i32_0 = arith.constant 0 : i32
    %c0_i32_1 = arith.constant 0 : i32
    return %c0_i32, %c0_i32_0 : i32, i32
  }
  func.func @transform_2(%arg0: i32) -> (i32, i32) {
    %c0_i32 = arith.constant 0 : i32
    %c0_i32_0 = arith.constant 0 : i32
    %c0_i32_1 = arith.constant 0 : i32
    return %c0_i32, %c0_i32_0 : i32, i32
  }
  func.func @transform_3(%arg0: i32) -> (i32, i32) {
    %c0_i32 = arith.constant 0 : i32
    %c0_i32_0 = arith.constant 0 : i32
    %c0_i32_1 = arith.constant 0 : i32
    return %c0_i32, %c0_i32_0 : i32, i32
  }
  func.func @transform_4(%arg0: i32) -> (i32, i32) {
    %c0_i32 = arith.constant 0 : i32
    %c0_i32_0 = arith.constant 0 : i32
    %c0_i32_1 = arith.constant 0 : i32
    return %c0_i32, %c0_i32_0 : i32, i32
  }
  func.func @transform_5(%arg0: i32) -> (i32, i32, i32) {
    %c0_i32 = arith.constant 0 : i32
    %c0_i32_0 = arith.constant 0 : i32
    %c0_i32_1 = arith.constant 0 : i32
    return %arg0, %c0_i32, %c0_i32_0 : i32, i32, i32
  }
}

</mosaic_0001>

<llo_original>
// kernel: squeeze.5
$region0: #{squeeze.5}
  %s0 = inlined_call_operand.vmem [shape: f32[8,3,3], index: 0, kind: input, shape index: {}]
  %s1 = inlined_call_operand.vmem [shape: f32[8,9], index: 1, kind: output, shape index: {}]
  $region1: #{squeeze.5} parent=0
    #allocation0 [shape = 'u8[12288]{0}', space=vmem, size = 0x3000, scoped, tag = 'scoped mem for input reshape']
    %s3 = sshllo.u32 0, 4
    %s4 = smul.addr 4, 2
    %s5 = scalar_lea.vmem %s0, %s4
    %v6 = vld [vmem:[%s5] sm:%s3]
    %s7 = scalar_lea.vmem [#allocation0], 16
    %8 = vst [vmem:[%s7] sm:%s3] %v6
    %s9 = scalar_lea.vmem %s0, 4
    %v10 = vld [vmem:[%s9] sm:%s3]
    %s11 = scalar_lea.vmem [#allocation0], 8
    %12 = vst [vmem:[%s11] sm:%s3] %v10
    %v13 = vld [vmem:[%s0] sm:%s3]
    %14 = vst [vmem:[#allocation0] sm:%s3] %v13
    %v15 = vld [vmem:[#allocation0] sm:$0x7]
    %vm16 = vcmask 64512
    %17 = vst.msk [vmem:[%s1] sm:$0x7] %vm16, %v15
    %s18 = scalar_lea.vmem [#allocation0], 8
    %v19 = vld [vmem:[%s18] sm:$0x7]
    %vm20 = vcmask 64512
    %s21 = scalar_lea.vmem %s1, 3
    %22 = vst.msk [vmem:[%s21] sm:$0x7] %vm20, %v19
    %s23 = scalar_lea.vmem [#allocation0], 16
    %v24 = vld [vmem:[%s23] sm:$0x7]
    %vm25 = vcmask 64512
    %s26 = scalar_lea.vmem %s1, 6
    %27 = vst.msk [vmem:[%s26] sm:$0x7] %vm25, %v24

// kernel: feed_forward_pallas.1
$region0: #{feed_forward_pallas.1}
  #allocation0 [shape = 'u32[]', space=smem, size = 0x4, offset = 0x4, fixed_abs, tag = 'smem constant byte address 0x4 - core index']
  #allocation1 [shape = 'u32[144,128]{1,0:T(1,128)}', space=vmem, size = 0x12000, scoped, tag = 'internal scratch']
  %s0 = inlined_call_operand.vmem [shape: f32[2,8,256], index: 0, kind: input, shape index: {}]
  %s1 = inlined_call_operand.vmem [shape: f32[4,256], index: 1, kind: input, shape index: {}]
  %s2 = inlined_call_operand.vmem [shape: f32[8,8], index: 2, kind: input, shape index: {}]
  %s3 = inlined_call_operand.vmem [shape: f32[8,9], index: 3, kind: input, shape index: {}]
  %s4 = inlined_call_operand.vmem [shape: f32[8,8], index: 4, kind: input, shape index: {}]
  %s5 = inlined_call_operand.vmem [shape: f32[2,8,256], index: 5, kind: output, shape index: {}]
  %s6 = sld [smem:[#allocation0]]
  $region53: #{feed_forward_pallas.1} parent=0
    _
  %s8 = ssub.s32 1, %s6
  %s9 = scalar_select 0, %s8, %s6
  loop: start=0, step=1, limit=4
  $region2: #{feed_forward_pallas.1} parent=0 // loop_pre_header
    _
  $region3: #{feed_forward_pallas.1} parent=0 // loop_header
    %s11 = sphi 0, %s15
    %p12 = scmp.ge.s32.totalorder %s11, 4
    %s21 = sphi 0, %s23
    %s24 = sphi 0, %s21
    %s25 = sphi 0, %s24
    %s41 = sphi 0, %s25
    %s45 = sphi 0, %s45
    %s47 = sphi 0, %s45
    %s48 = sphi 0, %s47
    %s62 = sphi 0, %s48
    %s66 = sphi 0, %s66
    %s68 = sphi 0, %s66
    %s69 = sphi 0, %s68
    %s83 = sphi 0, %s69
    %s87 = sphi 0, %s87
    %s89 = sphi 0, %s87
    %s90 = sphi 0, %s89
    %s104 = sphi 0, %s90
    %s108 = sphi 0, %s108
    %s110 = sphi 0, %s108
    %s111 = sphi 0, %s110
    %s125 = sphi 0, %s111
    %s131 = sphi 0, %s133
    %s134 = sphi 0, %s131
    %s135 = sphi 0, %s134
    %s151 = sphi 0, %s135
  $region4: #{feed_forward_pallas.1} parent=0 // loop_header_branch
    %14 = sbr.rel (%p12) target = $region8
  $region5: #{feed_forward_pallas.1} parent=0 // loop_body
    %s16 = ssub.s32 %s11, 1
    %s17 = ssub.s32 %s11, 2
    %s18 = sadd.s32 %s11, 1
    %s19 = ssub.s32 %s11, %s18
    %p20 = scmp.eq.s32.totalorder %s19, 0
    %s22 = sadd.s32 %s21, 1
    %s23 = scalar_select %p20, %s21, %s22
    %p26 = pneg %p20
    %p27 = scmp.eq.s32.totalorder %s11, 1
    %p28 = por %p26, %p27
    %p29 = scmp.ne.s32.totalorder %s21, %s24
    %p30 = scmp.eq.s32.totalorder %s11, 0
    %p31 = por %p29, %p30
    %p32 = scmp.ne.s32.totalorder %s21, %s24
    %p33 = scmp.eq.s32.totalorder %s16, 1
    %p34 = por %p32, %p33
    %p35 = scmp.ne.s32.totalorder %s24, %s25
    %p36 = scmp.eq.s32.totalorder %s16, 0
    %p37 = por %p35, %p36
    %p38 = scmp.ne.s32.totalorder %s24, %s25
    %p39 = scmp.eq.s32.totalorder %s17, 1
    %p40 = por %p38, %p39
    %p42 = scmp.ne.s32.totalorder %s25, %s41
    %p43 = scmp.eq.s32.totalorder %s17, 0
    %p44 = por %p42, %p43
    %s46 = sadd.s32 %s45, 1
    %p49 = scmp.eq.s32.totalorder %s11, 1
    %p50 = scmp.ne.s32.totalorder %s45, %s47
    %p51 = scmp.eq.s32.totalorder %s11, 0
    %p52 = por %p50, %p51
    %p53 = scmp.ne.s32.totalorder %s45, %s47
    %p54 = scmp.eq.s32.totalorder %s16, 1
    %p55 = por %p53, %p54
    %p56 = scmp.ne.s32.totalorder %s47, %s48
    %p57 = scmp.eq.s32.totalorder %s16, 0
    %p58 = por %p56, %p57
    %p59 = scmp.ne.s32.totalorder %s47, %s48
    %p60 = scmp.eq.s32.totalorder %s17, 1
    %p61 = por %p59, %p60
    %p63 = scmp.ne.s32.totalorder %s48, %s62
    %p64 = scmp.eq.s32.totalorder %s17, 0
    %p65 = por %p63, %p64
    %s67 = sadd.s32 %s66, 1
    %p70 = scmp.eq.s32.totalorder %s11, 1
    %p71 = scmp.ne.s32.totalorder %s66, %s68
    %p72 = scmp.eq.s32.totalorder %s11, 0
    %p73 = por %p71, %p72
    %p74 = scmp.ne.s32.totalorder %s66, %s68
    %p75 = scmp.eq.s32.totalorder %s16, 1
    %p76 = por %p74, %p75
    %p77 = scmp.ne.s32.totalorder %s68, %s69
    %p78 = scmp.eq.s32.totalorder %s16, 0
    %p79 = por %p77, %p78
    %p80 = scmp.ne.s32.totalorder %s68, %s69
    %p81 = scmp.eq.s32.totalorder %s17, 1
    %p82 = por %p80, %p81
    %p84 = scmp.ne.s32.totalorder %s69, %s83
    %p85 = scmp.eq.s32.totalorder %s17, 0
    %p86 = por %p84, %p85
    %s88 = sadd.s32 %s87, 1
    %p91 = scmp.eq.s32.totalorder %s11, 1
    %p92 = scmp.ne.s32.totalorder %s87, %s89
    %p93 = scmp.eq.s32.totalorder %s11, 0
    %p94 = por %p92, %p93
    %p95 = scmp.ne.s32.totalorder %s87, %s89
    %p96 = scmp.eq.s32.totalorder %s16, 1
    %p97 = por %p95, %p96
    %p98 = scmp.ne.s32.totalorder %s89, %s90
    %p99 = scmp.eq.s32.totalorder %s16, 0
    %p100 = por %p98, %p99
    %p101 = scmp.ne.s32.totalorder %s89, %s90
    %p102 = scmp.eq.s32.totalorder %s17, 1
    %p103 = por %p101, %p102
    %p105 = scmp.ne.s32.totalorder %s90, %s104
    %p106 = scmp.eq.s32.totalorder %s17, 0
    %p107 = por %p105, %p106
    %s109 = sadd.s32 %s108, 1
    %p112 = scmp.eq.s32.totalorder %s11, 1
    %p113 = scmp.ne.s32.totalorder %s108, %s110
    %p114 = scmp.eq.s32.totalorder %s11, 0
    %p115 = por %p113, %p114
    %p116 = scmp.ne.s32.totalorder %s108, %s110
    %p117 = scmp.eq.s32.totalorder %s16, 1
    %p118 = por %p116, %p117
    %p119 = scmp.ne.s32.totalorder %s110, %s111
    %p120 = scmp.eq.s32.totalorder %s16, 0
    %p121 = por %p119, %p120
    %p122 = scmp.ne.s32.totalorder %s110, %s111
    %p123 = scmp.eq.s32.totalorder %s17, 1
    %p124 = por %p122, %p123
    %p126 = scmp.ne.s32.totalorder %s111, %s125
    %p127 = scmp.eq.s32.totalorder %s17, 0
    %p128 = por %p126, %p127
    %s129 = ssub.s32 %s11, %s18
    %p130 = scmp.eq.s32.totalorder %s129, 0
    %s132 = sadd.s32 %s131, 1
    %s133 = scalar_select %p130, %s131, %s132
    %p136 = pneg %p130
    %p137 = scmp.eq.s32.totalorder %s11, 1
    %p138 = por %p136, %p137
    %p139 = scmp.ne.s32.totalorder %s131, %s134
    %p140 = scmp.eq.s32.totalorder %s11, 0
    %p141 = por %p139, %p140
    %p142 = scmp.ne.s32.totalorder %s131, %s134
    %p143 = scmp.eq.s32.totalorder %s16, 1
    %p144 = por %p142, %p143
    %p145 = scmp.ne.s32.totalorder %s134, %s135
    %p146 = scmp.eq.s32.totalorder %s16, 0
    %p147 = por %p145, %p146
    %p148 = scmp.ne.s32.totalorder %s134, %s135
    %p149 = scmp.eq.s32.totalorder %s17, 1
    %p150 = por %p148, %p149
    %p152 = scmp.ne.s32.totalorder %s135, %s151
    %p153 = scmp.eq.s32.totalorder %s17, 0
    %p154 = por %p152, %p153
    %p155 = scmp.le.s32.totalorder 1, %s11
    %p156 = scmp.lt.s32.totalorder %s11, 3
    %p157 = pnand %p155, %p156
    %p158 = pneg %p157
    // Predicated region
    $region9: #{feed_forward_pallas.1} parent=5 // pred_check
      _
    $region10: #{feed_forward_pallas.1} parent=5 // pred_check_branch
      %160 = sbr.rel (%p157) target = $region12
    $region11: #{feed_forward_pallas.1} parent=5 // pred_region
      %s161 = ssub.s32 %s11, 1
      // Predicated region
      $region13: #{feed_forward_pallas.1} parent=11 // pred_check
        %p162 = pneg %p58
      $region14: #{feed_forward_pallas.1} parent=11 // pred_check_branch
        %164 = sbr.rel (%p162) target = $region16
      $region15: #{feed_forward_pallas.1} parent=11 // pred_region
        _
      $region16: #{feed_forward_pallas.1} parent=11 // pred_fallthru
        _
      // Predicated region
      $region17: #{feed_forward_pallas.1} parent=11 // pred_check
        %p165 = pneg %p79
      $region18: #{feed_forward_pallas.1} parent=11 // pred_check_branch
        %167 = sbr.rel (%p165) target = $region20
      $region19: #{feed_forward_pallas.1} parent=11 // pred_region
        _
      $region20: #{feed_forward_pallas.1} parent=11 // pred_fallthru
        _
      // Predicated region
      $region21: #{feed_forward_pallas.1} parent=11 // pred_check
        %p168 = pneg %p100
      $region22: #{feed_forward_pallas.1} parent=11 // pred_check_branch
        %170 = sbr.rel (%p168) target = $region24
      $region23: #{feed_forward_pallas.1} parent=11 // pred_region
        _
      $region24: #{feed_forward_pallas.1} parent=11 // pred_fallthru
        _
      // Predicated region
      $region25: #{feed_forward_pallas.1} parent=11 // pred_check
        %p171 = pneg %p121
      $region26: #{feed_forward_pallas.1} parent=11 // pred_check_branch
        %173 = sbr.rel (%p171) target = $region28
      $region27: #{feed_forward_pallas.1} parent=11 // pred_region
        _
      $region28: #{feed_forward_pallas.1} parent=11 // pred_fallthru
        _
    $region12: #{feed_forward_pallas.1} parent=5 // pred_fallthru
      _
    %p174 = scmp.lt.s32.totalorder %s11, 2
    // Predicated region
    $region29: #{feed_forward_pallas.1} parent=5 // pred_check
      %p175 = pneg %p174
    $region30: #{feed_forward_pallas.1} parent=5 // pred_check_branch
      %177 = sbr.rel (%p175) target = $region32
    $region31: #{feed_forward_pallas.1} parent=5 // pred_region
      // Predicated region
      $region33: #{feed_forward_pallas.1} parent=31 // pred_check
        %p178 = pneg %p31
      $region34: #{feed_forward_pallas.1} parent=31 // pred_check_branch
        %180 = sbr.rel (%p178) target = $region36
      $region35: #{feed_forward_pallas.1} parent=31 // pred_region
        %p181 = scmp.lt.s32.totalorder %s11, 1
        %s182 = scalar_select %p181, %s11, 1
        %s183 = smul.addr %s182, 2
        %s184 = smul.addr %s183, 8
        %s185 = scalar_lea.vmem %s0, %s184
      $region36: #{feed_forward_pallas.1} parent=31 // pred_fallthru
        _
    $region32: #{feed_forward_pallas.1} parent=5 // pred_fallthru
      _
    %p186 = scmp.le.s32.totalorder 1, %s11
    %p187 = scmp.lt.s32.totalorder %s11, 3
    %p188 = pnand %p186, %p187
    %p189 = pneg %p188
    // Predicated region
    $region37: #{feed_forward_pallas.1} parent=5 // pred_check
      _
    $region38: #{feed_forward_pallas.1} parent=5 // pred_check_branch
      %191 = sbr.rel (%p188) target = $region40
    $region39: #{feed_forward_pallas.1} parent=5 // pred_region
      %s192 = ssub.s32 %s11, 1
      %p193 = scmp.lt.s32.totalorder %s16, 1
      %s194 = scalar_select %p193, %s16, 1
      %s195 = smul.addr %s194, 2
      %s196 = smul.addr %s195, 8
      %s197 = scalar_lea.vmem %s0, %s196
      %p198 = pneg %p37
      %p199 = pneg %p34
      %p200 = pneg %p58
      %p201 = pneg %p55
      %p202 = pneg %p79
      %p203 = pneg %p76
      %p204 = pneg %p100
      %p205 = pneg %p97
      %p206 = pneg %p121
      %p207 = pneg %p118
      %p208 = pneg %p147
      %p209 = pneg %p144
      %p210 = scmp.lt.s32.totalorder %s16, 1
      %s211 = scalar_select %p210, %s16, 1
      %s212 = smul.addr %s211, 2
      %s213 = smul.addr %s212, 8
      %s214 = scalar_lea.vmem %s5, %s213
      %p215 = scmp.lt.s32.totalorder %s16, 1
      %s216 = scalar_select %p215, %s16, 1
      %s217 = smul.addr %s216, 2
      %s218 = smul.addr %s217, 8
      %s219 = scalar_lea.vmem %s0, %s218
      %p220 = scmp.lt.s32.totalorder %s16, 1
      %s221 = scalar_select %p220, %s16, 1
      %s222 = smul.addr %s221, 2
      %s223 = smul.addr %s222, 8
      %s224 = scalar_lea.vmem %s5, %s223
      %v225 = vld [vmem:[%s219] sm:$0xff]
      %v226 = vld [vmem:[%s219 + $0x8] sm:$0xff]
      %v227 = vld [vmem:[%s2] sm:$0xff]
      %v228 = vld [vmem:[%s4] sm:$0xff]
      %v229 = vld [vmem:[%s3] sm:$0xff]
      %v230 = vld [vmem:[%s1] ss:$4 sm:$0x3]
      %s231 = scalar_lea.vmem %s1, 1
      %v232 = vld [vmem:[%s231] ss:$4 sm:$0x3]
      %s233 = scalar_lea.vmem %s1, 2
      %v234 = vld [vmem:[%s233] ss:$4 sm:$0x3]
      %s235 = scalar_lea.vmem %s1, 3
      %v236 = vld [vmem:[%s235] ss:$4 sm:$0x3]
      %vm237 = vcmask 64512
      %v239 = vsel %vm237, %v227, 0
      %241 = vmatprep.subr.mxu0 %v226
      %242 = vmatpush1.msra.mxu0 %v225
      %243 = vmatprep.subr.mxu0 0.0
      %244 = vmatpush1.msra.mxu0 0.0
      %245 = vmatprep.subr.mxu0 0.0
      %246 = vmatpush1.msra.mxu0 0.0
      %247 = vmatprep.subr.mxu0 0.0
      %248 = vmatpush1.msra.mxu0 0.0
      %249 = vmatprep.subr.mxu0 0.0
      %250 = vmatpush1.msra.mxu0 0.0
      %251 = vmatprep.subr.mxu0 0.0
      %252 = vmatpush1.msra.mxu0 0.0
      %253 = vmatprep.subr.mxu0 0.0
      %254 = vmatpush1.msra.mxu0 0.0
      %255 = vmatprep.subr.mxu0 0.0
      %256 = vmatpush1.msra.mxu0 0.0
      %257 = vmatprep.subr.mxu0 0.0
      %258 = vmatpush1.msra.mxu0 0.0
      %259 = vmatprep.subr.mxu0 0.0
      %260 = vmatpush1.msra.mxu0 0.0
      %261 = vmatprep.subr.mxu0 0.0
      %262 = vmatpush1.msra.mxu0 0.0
      %263 = vmatprep.subr.mxu0 0.0
      %264 = vmatpush1.msra.mxu0 0.0
      %265 = vmatprep.subr.mxu0 0.0
      %266 = vmatpush1.msra.mxu0 0.0
      %267 = vmatprep.subr.mxu0 0.0
      %268 = vmatpush1.msra.mxu0 0.0
      %269 = vmatprep.subr.mxu0 0.0
      %270 = vmatpush1.msra.mxu0 0.0
      %271 = vmatprep.subr.mxu0 0.0
      %272 = vmatpush1.msra.mxu0 0.0
      %273 = vmatprep.subr.mxu0 0.0
      %274 = vmatpush1.msra.mxu0 0.0
      %275 = vmatprep.subr.mxu0 0.0
      %276 = vmatpush1.msra.mxu0 0.0
      %277 = vmatprep.subr.mxu0 0.0
      %278 = vmatpush1.msra.mxu0 0.0
      %279 = vmatprep.subr.mxu0 0.0
      %280 = vmatpush1.msra.mxu0 0.0
      %281 = vmatprep.subr.mxu0 0.0
      %282 = vmatpush1.msra.mxu0 0.0
      %283 = vmatprep.subr.mxu0 0.0
      %284 = vmatpush1.msra.mxu0 0.0
      %285 = vmatprep.subr.mxu0 0.0
      %286 = vmatpush1.msra.mxu0 0.0
      %287 = vmatprep.subr.mxu0 0.0
      %288 = vmatpush1.msra.mxu0 0.0
      %289 = vmatprep.subr.mxu0 0.0
      %290 = vmatpush1.msra.mxu0 0.0
      %291 = vmatprep.subr.mxu0 0.0
      %292 = vmatpush1.msra.mxu0 0.0
      %293 = vmatprep.subr.mxu0 0.0
      %294 = vmatpush1.msra.mxu0 0.0
      %295 = vmatprep.subr.mxu0 0.0
      %296 = vmatpush1.msra.mxu0 0.0
      %297 = vmatprep.subr.mxu0 0.0
      %298 = vmatpush1.msra.mxu0 0.0
      %299 = vmatprep.subr.mxu0 0.0
      %300 = vmatpush1.msra.mxu0 0.0
      %301 = vmatprep.subr.mxu0 0.0
      %302 = vmatpush1.msra.mxu0 0.0
      %303 = vmatprep.subr.mxu0 0.0
      %304 = vmatpush1.msra.mxu0 0.0
      %305 = vmatprep.mubr.f32.mxu0 0.0
      %306 = vmatmul.mubr.f32.gmra.mrb[0].mxu0 %v239
      %v307 = vpop.f32.mrb[0].mxu0
      %v308 = vadd.f32 0.0, %v307
      %v309 = vpop.f32.mrb[0].mxu0
      %v310 = vadd.f32 0.0, %v309
      %311 = vdwg.mxu0
      %v312 = vmul.f32 %v308, 0.1
      %v313 = vmul.f32 %v310, 0.1
      %v314 = vmax.f32 %v308, %v312
      %v315 = vmax.f32 %v310, %v313
      %316 = vrot.lane.b32.xlu0 %v314, 16
      %v317 = vpop.permute.xlu0 %316
      %318 = vrot.lane.b32.xlu0 %v315, 16
      %v319 = vpop.permute.xlu0 %318
      %v320 = vlaneseq
      %v321 = vand.u32 %v320, 127
      %vm322 = vcmp.lt.s32.totalorder %v321, 16
      %v323 = vsel %vm322, %v317, %v319
      %v324 = vsel %vm322, %v319, %v317
      %v326 = vlaneseq
      %v327 = vshrl.u32 %v326, 7
      %v328 = vsub.s32 0, %v327
      %v329 = vrot.slane %v234, %v328
      %v330 = vlaneseq
      %v331 = vshrl.u32 %v330, 7
      %v332 = vsub.s32 1, %v331
      %v333 = vrot.slane %v234, %v332
      %v336 = vmul.f32 %v329, %v324
      %v337 = vmul.f32 %v333, %v323
      %338 = vrot.lane.b32.xlu0 %v314, 112
      %v339 = vpop.permute.xlu0 %338
      %340 = vrot.lane.b32.xlu0 %v315, 112
      %v341 = vpop.permute.xlu0 %340
      %vm342 = vcmp.lt.s32.totalorder %v321, 112
      %v343 = vsel %vm342, %v339, %v341
      %v344 = vsel %vm342, %v341, %v339
      %v346 = vlaneseq
      %v347 = vshrl.u32 %v346, 7
      %v348 = vsub.s32 0, %v347
      %v349 = vrot.slane %v236, %v348
      %v350 = vlaneseq
      %v351 = vshrl.u32 %v350, 7
      %v352 = vsub.s32 1, %v351
      %v353 = vrot.slane %v236, %v352
      %v356 = vmul.f32 %v349, %v343
      %v357 = vmul.f32 %v353, %v344
      %359 = vset.pattern.permute.xlu0 0
      %360 = vperm.xlu0 %359, %v229
      %v361 = vpop.permute.xlu0 %360
      %v363 = vmul.f32 %v361, %v336
      %v364 = vmul.f32 %v361, %v337
      %365 = vset.pattern.permute.xlu0 3
      %366 = vperm.xlu0 %365, %v229
      %v367 = vpop.permute.xlu0 %366
      %v369 = vmul.f32 %v367, %v314
      %v370 = vmul.f32 %v367, %v315
      %v371 = vadd.f32 %v363, %v369
      %v372 = vadd.f32 %v364, %v370
      %373 = vset.pattern.permute.xlu0 6
      %374 = vperm.xlu0 %373, %v229
      %v375 = vpop.permute.xlu0 %374
      %v377 = vmul.f32 %v375, %v356
      %v378 = vmul.f32 %v375, %v357
      %v379 = vadd.f32 %v371, %v377
      %v380 = vadd.f32 %v372, %v378
      %381 = vset.pattern.permute.xlu0 2
      %382 = vperm.xlu0 %381, %v229
      %v383 = vpop.permute.xlu0 %382
      %v385 = vmul.f32 %v383, %v336
      %v386 = vmul.f32 %v383, %v337
      %387 = vset.pattern.permute.xlu0 5
      %388 = vperm.xlu0 %387, %v229
      %v389 = vpop.permute.xlu0 %388
      %v391 = vmul.f32 %v389, %v314
      %v392 = vmul.f32 %v389, %v315
      %v393 = vadd.f32 %v385, %v391
      %v394 = vadd.f32 %v386, %v392
      %395 = vset.pattern.permute.xlu0 8
      %396 = vperm.xlu0 %395, %v229
      %v397 = vpop.permute.xlu0 %396
      %v399 = vmul.f32 %v397, %v356
      %v400 = vmul.f32 %v397, %v357
      %v401 = vadd.f32 %v393, %v399
      %v402 = vadd.f32 %v394, %v400
      %403 = vset.pattern.permute.xlu0 1
      %404 = vperm.xlu0 %403, %v229
      %v405 = vpop.permute.xlu0 %404
      %v407 = vmul.f32 %v405, %v336
      %v408 = vmul.f32 %v405, %v337
      %409 = vset.pattern.permute.xlu0 4
      %410 = vperm.xlu0 %409, %v229
      %v411 = vpop.permute.xlu0 %410
      %v413 = vmul.f32 %v411, %v314
      %v414 = vmul.f32 %v411, %v315
      %v415 = vadd.f32 %v407, %v413
      %v416 = vadd.f32 %v408, %v414
      %417 = vset.pattern.permute.xlu0 7
      %418 = vperm.xlu0 %417, %v229
      %v419 = vpop.permute.xlu0 %418
      %v421 = vmul.f32 %v419, %v356
      %v422 = vmul.f32 %v419, %v357
      %v423 = vadd.f32 %v415, %v421
      %v424 = vadd.f32 %v416, %v422
      %425 = vrot.lane.b32.xlu0 %v379, 1
      %v426 = vpop.permute.xlu0 %425
      %427 = vrot.lane.b32.xlu0 %v380, 1
      %v428 = vpop.permute.xlu0 %427
      %vm429 = vcmp.lt.s32.totalorder %v321, 1
      %v430 = vsel %vm429, %v426, %v428
      %v431 = vsel %vm429, %v428, %v426
      %v433 = vlaneseq
      %v434 = vshrl.u32 %v433, 7
      %v435 = vsub.s32 0, %v434
      %v436 = vrot.slane %v230, %v435
      %v437 = vlaneseq
      %v438 = vshrl.u32 %v437, 7
      %v439 = vsub.s32 1, %v438
      %v440 = vrot.slane %v230, %v439
      %v443 = vmul.f32 %v436, %v431
      %v444 = vmul.f32 %v440, %v430
      %v445 = vadd.f32 %v423, %v443
      %v446 = vadd.f32 %v424, %v444
      %447 = vrot.lane.b32.xlu0 %v401, 127
      %v448 = vpop.permute.xlu0 %447
      %449 = vrot.lane.b32.xlu0 %v402, 127
      %v450 = vpop.permute.xlu0 %449
      %vm451 = vcmp.lt.s32.totalorder %v321, 127
      %v452 = vsel %vm451, %v448, %v450
      %v453 = vsel %vm451, %v450, %v448
      %v455 = vlaneseq
      %v456 = vshrl.u32 %v455, 7
      %v457 = vsub.s32 0, %v456
      %v458 = vrot.slane %v232, %v457
      %v459 = vlaneseq
      %v460 = vshrl.u32 %v459, 7
      %v461 = vsub.s32 1, %v460
      %v462 = vrot.slane %v232, %v461
      %v465 = vmul.f32 %v458, %v452
      %v466 = vmul.f32 %v462, %v453
      %v467 = vadd.f32 %v445, %v465
      %v468 = vadd.f32 %v446, %v466
      %v469 = vmul.f32 %v467, 0.1
      %v470 = vmul.f32 %v468, 0.1
      %v471 = vmax.f32 %v467, %v469
      %v472 = vmax.f32 %v468, %v470
      %v474 = vsel %vm237, %v228, 0
      %476 = vmatprep.subr.mxu0 %v472
      %477 = vmatpush1.msra.mxu0 %v471
      %478 = vmatprep.subr.mxu0 0.0
      %479 = vmatpush1.msra.mxu0 0.0
      %480 = vmatprep.subr.mxu0 0.0
      %481 = vmatpush1.msra.mxu0 0.0
      %482 = vmatprep.subr.mxu0 0.0
      %483 = vmatpush1.msra.mxu0 0.0
      %484 = vmatprep.subr.mxu0 0.0
      %485 = vmatpush1.msra.mxu0 0.0
      %486 = vmatprep.subr.mxu0 0.0
      %487 = vmatpush1.msra.mxu0 0.0
      %488 = vmatprep.subr.mxu0 0.0
      %489 = vmatpush1.msra.mxu0 0.0
      %490 = vmatprep.subr.mxu0 0.0
      %491 = vmatpush1.msra.mxu0 0.0
      %492 = vmatprep.subr.mxu0 0.0
      %493 = vmatpush1.msra.mxu0 0.0
      %494 = vmatprep.subr.mxu0 0.0
      %495 = vmatpush1.msra.mxu0 0.0
      %496 = vmatprep.subr.mxu0 0.0
      %497 = vmatpush1.msra.mxu0 0.0
      %498 = vmatprep.subr.mxu0 0.0
      %499 = vmatpush1.msra.mxu0 0.0
      %500 = vmatprep.subr.mxu0 0.0
      %501 = vmatpush1.msra.mxu0 0.0
      %502 = vmatprep.subr.mxu0 0.0
      %503 = vmatpush1.msra.mxu0 0.0
      %504 = vmatprep.subr.mxu0 0.0
      %505 = vmatpush1.msra.mxu0 0.0
      %506 = vmatprep.subr.mxu0 0.0
      %507 = vmatpush1.msra.mxu0 0.0
      %508 = vmatprep.subr.mxu0 0.0
      %509 = vmatpush1.msra.mxu0 0.0
      %510 = vmatprep.subr.mxu0 0.0
      %511 = vmatpush1.msra.mxu0 0.0
      %512 = vmatprep.subr.mxu0 0.0
      %513 = vmatpush1.msra.mxu0 0.0
      %514 = vmatprep.subr.mxu0 0.0
      %515 = vmatpush1.msra.mxu0 0.0
      %516 = vmatprep.subr.mxu0 0.0
      %517 = vmatpush1.msra.mxu0 0.0
      %518 = vmatprep.subr.mxu0 0.0
      %519 = vmatpush1.msra.mxu0 0.0
      %520 = vmatprep.subr.mxu0 0.0
      %521 = vmatpush1.msra.mxu0 0.0
      %522 = vmatprep.subr.mxu0 0.0
      %523 = vmatpush1.msra.mxu0 0.0
      %524 = vmatprep.subr.mxu0 0.0
      %525 = vmatpush1.msra.mxu0 0.0
      %526 = vmatprep.subr.mxu0 0.0
      %527 = vmatpush1.msra.mxu0 0.0
      %528 = vmatprep.subr.mxu0 0.0
      %529 = vmatpush1.msra.mxu0 0.0
      %530 = vmatprep.subr.mxu0 0.0
      %531 = vmatpush1.msra.mxu0 0.0
      %532 = vmatprep.subr.mxu0 0.0
      %533 = vmatpush1.msra.mxu0 0.0
      %534 = vmatprep.subr.mxu0 0.0
      %535 = vmatpush1.msra.mxu0 0.0
      %536 = vmatprep.subr.mxu0 0.0
      %537 = vmatpush1.msra.mxu0 0.0
      %538 = vmatprep.subr.mxu0 0.0
      %539 = vmatpush1.msra.mxu0 0.0
      %540 = vmatprep.mubr.f32.mxu0 0.0
      %541 = vmatmul.mubr.f32.gmra.mrb[0].mxu0 %v474
      %v542 = vpop.f32.mrb[0].mxu0
      %v543 = vadd.f32 0.0, %v542
      %v544 = vpop.f32.mrb[0].mxu0
      %v545 = vadd.f32 0.0, %v544
      %546 = vdwg.mxu0
      %547 = vst [vmem:[%s224] sm:$0xff] %v543
      %548 = vst [vmem:[%s224 + $0x8] sm:$0xff] %v545
      %p549 = scmp.lt.s32.totalorder %s16, 1
      %s550 = scalar_select %p549, %s16, 1
      %s551 = smul.addr %s550, 2
      %s552 = smul.addr %s551, 8
      %s553 = scalar_lea.vmem %s5, %s552
      // Predicated region
      $region41: #{feed_forward_pallas.1} parent=39 // pred_check
        %p554 = pneg %p144
      $region42: #{feed_forward_pallas.1} parent=39 // pred_check_branch
        %556 = sbr.rel (%p554) target = $region44
      $region43: #{feed_forward_pallas.1} parent=39 // pred_region
        _
      $region44: #{feed_forward_pallas.1} parent=39 // pred_fallthru
        _
    $region40: #{feed_forward_pallas.1} parent=5 // pred_fallthru
      _
    %p557 = scmp.le.s32.totalorder 2, %s11
    // Predicated region
    $region45: #{feed_forward_pallas.1} parent=5 // pred_check
      %p558 = pneg %p557
    $region46: #{feed_forward_pallas.1} parent=5 // pred_check_branch
      %560 = sbr.rel (%p558) target = $region48
    $region47: #{feed_forward_pallas.1} parent=5 // pred_region
      %s561 = ssub.s32 %s11, 2
      // Predicated region
      $region49: #{feed_forward_pallas.1} parent=47 // pred_check
        %p562 = pneg %p150
      $region50: #{feed_forward_pallas.1} parent=47 // pred_check_branch
        %564 = sbr.rel (%p562) target = $region52
      $region51: #{feed_forward_pallas.1} parent=47 // pred_region
        %p565 = scmp.lt.s32.totalorder %s17, 1
        %s566 = scalar_select %p565, %s17, 1
        %s567 = smul.addr %s566, 2
        %s568 = smul.addr %s567, 8
        %s569 = scalar_lea.vmem %s5, %s568
      $region52: #{feed_forward_pallas.1} parent=47 // pred_fallthru
        _
    $region48: #{feed_forward_pallas.1} parent=5 // pred_fallthru
      _
  $region6: #{feed_forward_pallas.1} parent=0 // loop_footer
    %s15 = sadd.s32 1, %s11
  $region7: #{feed_forward_pallas.1} parent=0 // loop_footer_branch
    %10 = sbr.rel target = $region3
  $region8: #{feed_forward_pallas.1} parent=0 // loop_exit
    _

</llo_original>
